<compile_context>
chip_gen: v5e
topology: v5e:2x2
jax: 0.10.0
libtpu: 0.0.40
codegen_flags: <defaults>
</compile_context>

<pallas_src>
import functools

import jax
import jax.numpy as jnp
from jax.experimental import pallas as pl
from jax.experimental.pallas import tpu as pltpu


def egat_kernel(h_ref, msg_ref, mask_ref, w_ref, a1_ref, a2_ref, u_ref, j_ref, v_ref,
                out_ref, *, n_agent, graphs_per_step):
    A = n_agent
    AA = A * A
    G = graphs_per_step

    # ---- fused projections for all G graphs in this step (MXU) -----------------------------
    W = w_ref[...]                                                            # (D, Hd)
    h_proj = jnp.dot(h_ref[...], W, preferred_element_type=jnp.float32)       # (G*A, Hd)
    H_flat = jnp.dot(msg_ref[...], W, preferred_element_type=jnp.float32)     # (G*A*A, Hd)

    # Attention-score terms as two tiny K=Hd dots on the projected activations.
    e_h_all = jnp.dot(h_proj, a1_ref[...], preferred_element_type=jnp.float32)  # (G*A, 1)
    g_all = jnp.dot(H_flat, a2_ref[...], preferred_element_type=jnp.float32)    # (G*A*A, 1)

    # Precomputed selectors (constant-index VMEM residents):
    #   U[i, m] = [m // A == i]   (A, A*A)
    #   J[j, m] = [m %  A == j]   (A, A*A)
    #   V[m, j] = [m %  A == j]   (A*A, A)
    U = u_ref[...]
    J = j_ref[...]
    V = v_ref[...]

    # Current step's graphs from the whole-batch resident mask.
    base = pl.program_id(0) * G
    mask_blk = mask_ref[pl.ds(base, G)]                                       # (G, A, A)

    # ---- per-graph scores / masked softmax / weighted sum / ELU ----------------------------
    # Static Python loop == fully-unrolled fori_loop; G is small and every slice below is a
    # sublane-aligned static slice of the fused results above.
    for g in range(G):
        hp = h_proj[g * A:(g + 1) * A, :]                                     # (A, Hd)
        Hg = H_flat[g * AA:(g + 1) * AA, :]                                    # (A*A, Hd), row m=i*A+j
        e_h = e_h_all[g * A:(g + 1) * A, :]                                    # (A, 1)
        gcol = g_all[g * AA:(g + 1) * AA, :]                                   # (A*A, 1)
        mask = mask_blk[g]                                                     # (A, A)

        # e_H[i, j] = gcol[i*A + j], realized as U @ (gcol * V): a tiny MXU op instead of a
        # sublane->lane reshape of the (A*A, 1) column.
        e_H = jnp.dot(U, gcol * V, preferred_element_type=jnp.float32)         # (A, A)

        # scores, LeakyReLU(0.2), masked dim-0 softmax (mask-as-zero, faithful to the module)
        E = e_h + e_H
        E = jnp.where(E > 0, E, 0.2 * E)
        E_mask = E * mask
        mmax = jnp.max(E_mask, axis=0, keepdims=True)
        ex = jnp.exp(E_mask - mmax)
        denom = jnp.sum(ex, axis=0, keepdims=True)
        alpha = ex * pl.reciprocal(denom, approx=True)
        alpha_mask = alpha * mask

        # weighted sum: ws[i] = sum_j alpha_mask[i, j] * Hg[i*A + j]
        # Expand alpha onto the flattened m axis with one tiny matmul, zero it outside block i,
        # then contract against Hg on the MXU — no (A, A, Hd) broadcast product.
        alpha_rep = jnp.dot(alpha_mask, J, preferred_element_type=jnp.float32)  # (A, A*A)
        S = U * alpha_rep
        ws = jnp.dot(S, Hg, preferred_element_type=jnp.float32)                 # (A, Hd)

        # ELU(h_proj + ws), alpha=1
        z = hp + ws
        out_ref[g * A:(g + 1) * A, :] = jnp.where(
            z > 0, z, jnp.exp(jnp.minimum(z, 0.0)) - 1.0)


def _pick_graphs_per_step(n_graphs, n_agent):
    """Largest G dividing B that keeps >= 2 grid steps (v7x megacore) and sublane-aligned
    per-step row blocks; falls back to one full-batch step (block == full array, always legal)."""
    if n_graphs <= 1:
        return 1
    for G in range(n_graphs // 2, 0, -1):
        if n_graphs % G == 0 and (G * n_agent) % 8 == 0:
            return G
    return n_graphs


def e_gat_forward_batched(h, message, mask, W, a_w, graphs_per_step=None):
    """h: (B, A, D), message: (B, A, A, D), mask: (B, A, A) float 0/1,
    W: (D, Hd), a_w: (1, 2*Hd) (nn.Linear(2*Hd, 1, bias=False).weight).  Returns (B, A, Hd)."""
    B, A, D = h.shape
    Hd = W.shape[1]
    AA = A * A

    G = _pick_graphs_per_step(B, A) if graphs_per_step is None else graphs_per_step
    assert B % G == 0, (B, G)
    steps = B // G

    # Flat 2-D views (contiguous leading-dim merges -> no HBM copies, no concat of message).
    h_flat = h.astype(jnp.float32).reshape(B * A, D)
    msg_flat = message.astype(jnp.float32).reshape(B * AA, D)
    mask_f = mask.astype(jnp.float32)

    # Attention-vector halves as (Hd, 1) columns.
    a1 = a_w[0, :Hd].astype(jnp.float32).reshape(Hd, 1)
    a2 = a_w[0, Hd:].astype(jnp.float32).reshape(Hd, 1)

    # Block-structure selectors, built once outside the kernel (grid is a sequential loop).
    m_idx = jnp.arange(AA)
    i_idx = jnp.arange(A)
    U = (m_idx[None, :] // A == i_idx[:, None]).astype(jnp.float32)    # (A, AA)
    J = (m_idx[None, :] % A == i_idx[:, None]).astype(jnp.float32)     # (A, AA)
    V = (m_idx[:, None] % A == i_idx[None, :]).astype(jnp.float32)     # (AA, A)

    const2 = lambda s: (0, 0)
    kernel = functools.partial(egat_kernel, n_agent=A, graphs_per_step=G)
    out_flat = pl.pallas_call(
        kernel,
        out_shape=jax.ShapeDtypeStruct((B * A, Hd), jnp.float32),
        grid=(steps,),
        in_specs=[
            pl.BlockSpec((G * A, D), lambda s: (s, 0)),        # h, per-step block
            pl.BlockSpec((G * AA, D), lambda s: (s, 0)),       # message, per-step block
            pl.BlockSpec((B, A, A), lambda s: (0, 0, 0)),      # mask, whole-batch VMEM-resident
            pl.BlockSpec((D, Hd), const2),                     # W, VMEM-resident
            pl.BlockSpec((Hd, 1), const2),                     # a1
            pl.BlockSpec((Hd, 1), const2),                     # a2
            pl.BlockSpec((A, AA), const2),                     # U
            pl.BlockSpec((A, AA), const2),                     # J
            pl.BlockSpec((AA, A), const2),                     # V
        ],
        out_specs=pl.BlockSpec((G * A, Hd), lambda s: (s, 0)),
        compiler_params=pltpu.CompilerParams(dimension_semantics=("parallel",)),
    )(h_flat, msg_flat, mask_f, W.astype(jnp.float32), a1, a2, U, J, V)
    return out_flat.reshape(B, A, Hd)


def e_gat_forward(h, message, mask, W, a_w):
    """Module-signature forward for a single graph (n_agent taken from the shapes)."""
    return e_gat_forward_batched(h[None], message[None], mask[None], W, a_w)[0]


def e_gat_reference(h, message, mask, W, a_w):
    """Pure-JAX transcription of the PyTorch forward (single graph), for verification."""
    hp = h @ W                                              # (A, Hd)
    Hp = jnp.einsum("ijd,dh->ijh", message, W)              # (A, A, Hd)
    h_rep = jnp.broadcast_to(hp[:, None, :], Hp.shape)      # repeat_at(h, -2, A)
    E = jnp.concatenate([h_rep, Hp], axis=-1) @ a_w[0]      # (A, A)
    E = jnp.where(E > 0, E, 0.2 * E)                        # LeakyReLU(0.2)
    E_mask = E * mask
    alpha = jax.nn.softmax(E_mask, axis=0)
    alpha_mask = alpha * mask
    ws = jnp.einsum("ij,ijh->ih", alpha_mask, Hp)           # (A, Hd)
    z = hp + ws
    return jnp.where(z > 0, z, jnp.expm1(z))                # ELU(alpha=1)


if __name__ == "__main__":
    B = 4          # independent graphs (grid has B // G = 2 parallel steps)
    A = 8          # n_agent (AlgorithmConfig.n_agent)
    D_in = 16      # input_dim
    Hd = 128       # hidden_dim

    key = jax.random.PRNGKey(0)
    k1, k2, k3, k4, k5 = jax.random.split(key, 5)

    # Deterministic param init, matching init_parameters(): U(-1/sqrt(size(-1)), +1/sqrt(size(-1)))
    stdv_w = 1.0 / (Hd ** 0.5)
    W = jax.random.uniform(k1, (D_in, Hd), jnp.float32, -stdv_w, stdv_w)
    stdv_a = 1.0 / ((2 * Hd) ** 0.5)
    a_w = jax.random.uniform(k2, (1, 2 * Hd), jnp.float32, -stdv_a, stdv_a)

    h = jax.random.normal(k3, (B, A, D_in), jnp.float32)
    message = jax.random.normal(k4, (B, A, A, D_in), jnp.float32)
    mask = (jax.random.uniform(k5, (B, A, A)) > 0.3).astype(jnp.float32)

    out = e_gat_forward_batched(h, message, mask, W, a_w)
    out = jax.block_until_ready(out)

    expected = jax.vmap(e_gat_reference, in_axes=(0, 0, 0, None, None))(h, message, mask, W, a_w)
    assert out.shape == (B, A, Hd)
    assert jnp.allclose(out, expected, atol=3e-3, rtol=3e-3), \
        float(jnp.max(jnp.abs(out - expected)))

    # Single-graph (module-signature) path through the same kernel.
    out1 = jax.block_until_ready(e_gat_forward(h[0], message[0], mask[0], W, a_w))
    assert jnp.allclose(out1, expected[0], atol=3e-3, rtol=3e-3)

    print("KERNEL_OK")
</pallas_src>

<mosaic_0001>
module attributes {stable_mosaic.version = 11 : i64} {
  func.func @egat_kernel(%arg0: i32, %arg1: memref<16x16xf32, #tpu.memory_space<vmem>>, %arg2: memref<128x16xf32, #tpu.memory_space<vmem>>, %arg3: memref<4x8x8xf32, #tpu.memory_space<vmem>>, %arg4: memref<16x128xf32, #tpu.memory_space<vmem>>, %arg5: memref<128x1xf32, #tpu.memory_space<vmem>>, %arg6: memref<128x1xf32, #tpu.memory_space<vmem>>, %arg7: memref<8x64xf32, #tpu.memory_space<vmem>>, %arg8: memref<8x64xf32, #tpu.memory_space<vmem>>, %arg9: memref<64x8xf32, #tpu.memory_space<vmem>>, %arg10: memref<16x128xf32, #tpu.memory_space<vmem>>) attributes {dimension_semantics = [#tpu.dimension_semantics<parallel>], iteration_bounds = array<i64: 2>, scalar_prefetch = 0 : i64, scratch_operands = 0 : i64, tpu.core_type = #tpu.core_type<tc>, window_params = [{transform_indices = @transform_0, window_bounds = array<i64: 16, 16>}, {transform_indices = @transform_1, window_bounds = array<i64: 128, 16>}, {pipeline_mode = #tpu.pipeline_mode<synchronous>, transform_indices = @transform_2, window_bounds = array<i64: 4, 8, 8>}, {pipeline_mode = #tpu.pipeline_mode<synchronous>, transform_indices = @transform_3, window_bounds = array<i64: 16, 128>}, {pipeline_mode = #tpu.pipeline_mode<synchronous>, transform_indices = @transform_4, window_bounds = array<i64: 128, 1>}, {pipeline_mode = #tpu.pipeline_mode<synchronous>, transform_indices = @transform_5, window_bounds = array<i64: 128, 1>}, {pipeline_mode = #tpu.pipeline_mode<synchronous>, transform_indices = @transform_6, window_bounds = array<i64: 8, 64>}, {pipeline_mode = #tpu.pipeline_mode<synchronous>, transform_indices = @transform_7, window_bounds = array<i64: 8, 64>}, {pipeline_mode = #tpu.pipeline_mode<synchronous>, transform_indices = @transform_8, window_bounds = array<i64: 64, 8>}, {transform_indices = @transform_9, window_bounds = array<i64: 16, 128>}]} {
    %c0 = arith.constant 0 : index
    %c0_0 = arith.constant 0 : index
    %0 = vector.load %arg4[%c0, %c0_0] : memref<16x128xf32, #tpu.memory_space<vmem>>, vector<16x128xf32>
    %c0_1 = arith.constant 0 : index
    %c0_2 = arith.constant 0 : index
    %1 = vector.load %arg1[%c0_1, %c0_2] : memref<16x16xf32, #tpu.memory_space<vmem>>, vector<16x16xf32>
    %cst = arith.constant dense<0.000000e+00> : vector<16x128xf32>
    %2 = tpu.matmul %1, %0, %cst {dimension_numbers = #tpu.dot_dimension_numbers<[1], [0], [0], [1], [0, 0, 1, 1], [], []>} : vector<16x16xf32>, vector<16x128xf32>, vector<16x128xf32> -> vector<16x128xf32>
    %c0_3 = arith.constant 0 : index
    %c0_4 = arith.constant 0 : index
    %3 = vector.load %arg2[%c0_3, %c0_4] : memref<128x16xf32, #tpu.memory_space<vmem>>, vector<128x16xf32>
    %cst_5 = arith.constant dense<0.000000e+00> : vector<128x128xf32>
    %4 = tpu.matmul %3, %0, %cst_5 {dimension_numbers = #tpu.dot_dimension_numbers<[1], [0], [0], [1], [0, 0, 1, 1], [], []>} : vector<128x16xf32>, vector<16x128xf32>, vector<128x128xf32> -> vector<128x128xf32>
    %c0_6 = arith.constant 0 : index
    %c0_7 = arith.constant 0 : index
    %5 = vector.load %arg5[%c0_6, %c0_7] : memref<128x1xf32, #tpu.memory_space<vmem>>, vector<128x1xf32>
    %cst_8 = arith.constant dense<0.000000e+00> : vector<16x1xf32>
    %6 = tpu.matmul %2, %5, %cst_8 {dimension_numbers = #tpu.dot_dimension_numbers<[1], [0], [0], [1], [0, 0, 1, 1], [], []>} : vector<16x128xf32>, vector<128x1xf32>, vector<16x1xf32> -> vector<16x1xf32>
    %c0_9 = arith.constant 0 : index
    %c0_10 = arith.constant 0 : index
    %7 = vector.load %arg6[%c0_9, %c0_10] : memref<128x1xf32, #tpu.memory_space<vmem>>, vector<128x1xf32>
    %cst_11 = arith.constant dense<0.000000e+00> : vector<128x1xf32>
    %8 = tpu.matmul %4, %7, %cst_11 {dimension_numbers = #tpu.dot_dimension_numbers<[1], [0], [0], [1], [0, 0, 1, 1], [], []>} : vector<128x128xf32>, vector<128x1xf32>, vector<128x1xf32> -> vector<128x1xf32>
    %c0_12 = arith.constant 0 : index
    %c0_13 = arith.constant 0 : index
    %9 = vector.load %arg7[%c0_12, %c0_13] : memref<8x64xf32, #tpu.memory_space<vmem>>, vector<8x64xf32>
    %c0_14 = arith.constant 0 : index
    %c0_15 = arith.constant 0 : index
    %10 = vector.load %arg8[%c0_14, %c0_15] : memref<8x64xf32, #tpu.memory_space<vmem>>, vector<8x64xf32>
    %c0_16 = arith.constant 0 : index
    %c0_17 = arith.constant 0 : index
    %11 = vector.load %arg9[%c0_16, %c0_17] : memref<64x8xf32, #tpu.memory_space<vmem>>, vector<64x8xf32>
    %c2_i32 = arith.constant 2 : i32
    %12 = arith.muli %arg0, %c2_i32 : i32
    %13 = arith.index_cast %12 : i32 to index
    %c0_18 = arith.constant 0 : index
    %c0_19 = arith.constant 0 : index
    %14 = vector.load %arg3[%13, %c0_18, %c0_19] : memref<4x8x8xf32, #tpu.memory_space<vmem>>, vector<2x8x8xf32>
    %15 = vector.extract_strided_slice %2 {offsets = [0, 0], sizes = [8, 128], strides = [1, 1]} : vector<16x128xf32> to vector<8x128xf32>
    %16 = vector.extract_strided_slice %4 {offsets = [0, 0], sizes = [64, 128], strides = [1, 1]} : vector<128x128xf32> to vector<64x128xf32>
    %17 = vector.extract_strided_slice %6 {offsets = [0, 0], sizes = [8, 1], strides = [1, 1]} : vector<16x1xf32> to vector<8x1xf32>
    %18 = vector.extract_strided_slice %8 {offsets = [0, 0], sizes = [64, 1], strides = [1, 1]} : vector<128x1xf32> to vector<64x1xf32>
    %19 = vector.extract_strided_slice %14 {offsets = [0, 0, 0], sizes = [1, 8, 8], strides = [1, 1, 1]} : vector<2x8x8xf32> to vector<1x8x8xf32>
    %20 = vector.shape_cast %19 : vector<1x8x8xf32> to vector<8x8xf32>
    %21 = vector.broadcast %18 : vector<64x1xf32> to vector<64x8xf32>
    %22 = arith.mulf %21, %11 : vector<64x8xf32>
    %cst_20 = arith.constant dense<0.000000e+00> : vector<8x8xf32>
    %23 = tpu.matmul %9, %22, %cst_20 {dimension_numbers = #tpu.dot_dimension_numbers<[1], [0], [0], [1], [0, 0, 1, 1], [], []>} : vector<8x64xf32>, vector<64x8xf32>, vector<8x8xf32> -> vector<8x8xf32>
    %24 = vector.broadcast %17 : vector<8x1xf32> to vector<8x8xf32>
    %25 = arith.addf %24, %23 : vector<8x8xf32>
    %cst_21 = arith.constant 0.000000e+00 : f32
    %26 = vector.broadcast %cst_21 : f32 to vector<8x8xf32>
    %27 = arith.cmpf ogt, %25, %26 : vector<8x8xf32>
    %cst_22 = arith.constant 2.000000e-01 : f32
    %28 = vector.broadcast %cst_22 : f32 to vector<8x8xf32>
    %29 = arith.mulf %28, %25 : vector<8x8xf32>
    %30 = arith.select %27, %25, %29 : vector<8x8xi1>, vector<8x8xf32>
    %31 = arith.mulf %30, %20 : vector<8x8xf32>
    %cst_23 = arith.constant dense<0xFF800000> : vector<8xf32>
    %32 = vector.multi_reduction <maximumf>, %31, %cst_23 [0] : vector<8x8xf32> to vector<8xf32>
    %33 = vector.shape_cast %32 : vector<8xf32> to vector<1x8xf32>
    %34 = vector.broadcast %33 : vector<1x8xf32> to vector<8x8xf32>
    %35 = arith.subf %31, %34 : vector<8x8xf32>
    %36 = math.exp %35 : vector<8x8xf32>
    %cst_24 = arith.constant dense<0.000000e+00> : vector<8xf32>
    %37 = vector.multi_reduction <add>, %36, %cst_24 [0] : vector<8x8xf32> to vector<8xf32>
    %38 = vector.shape_cast %37 : vector<8xf32> to vector<1x8xf32>
    %39 = tpu.reciprocal %38 {approx = true} : vector<1x8xf32> -> vector<1x8xf32>
    %40 = vector.broadcast %39 : vector<1x8xf32> to vector<8x8xf32>
    %41 = arith.mulf %36, %40 : vector<8x8xf32>
    %42 = arith.mulf %41, %20 : vector<8x8xf32>
    %cst_25 = arith.constant dense<0.000000e+00> : vector<8x64xf32>
    %43 = tpu.matmul %42, %10, %cst_25 {dimension_numbers = #tpu.dot_dimension_numbers<[1], [0], [0], [1], [0, 0, 1, 1], [], []>} : vector<8x8xf32>, vector<8x64xf32>, vector<8x64xf32> -> vector<8x64xf32>
    %44 = arith.mulf %9, %43 : vector<8x64xf32>
    %cst_26 = arith.constant dense<0.000000e+00> : vector<8x128xf32>
    %45 = tpu.matmul %44, %16, %cst_26 {dimension_numbers = #tpu.dot_dimension_numbers<[1], [0], [0], [1], [0, 0, 1, 1], [], []>} : vector<8x64xf32>, vector<64x128xf32>, vector<8x128xf32> -> vector<8x128xf32>
    %46 = arith.addf %15, %45 : vector<8x128xf32>
    %cst_27 = arith.constant 0.000000e+00 : f32
    %47 = vector.broadcast %cst_27 : f32 to vector<8x128xf32>
    %48 = arith.cmpf ogt, %46, %47 : vector<8x128xf32>
    %cst_28 = arith.constant 0.000000e+00 : f32
    %49 = vector.broadcast %cst_28 : f32 to vector<8x128xf32>
    %50 = arith.minimumf %46, %49 : vector<8x128xf32>
    %51 = math.exp %50 : vector<8x128xf32>
    %cst_29 = arith.constant 1.000000e+00 : f32
    %52 = vector.broadcast %cst_29 : f32 to vector<8x128xf32>
    %53 = arith.subf %51, %52 : vector<8x128xf32>
    %54 = arith.select %48, %46, %53 : vector<8x128xi1>, vector<8x128xf32>
    %c0_30 = arith.constant 0 : index
    %c0_31 = arith.constant 0 : index
    %55 = vector.load %arg10[%c0_30, %c0_31] : memref<16x128xf32, #tpu.memory_space<vmem>>, vector<8x128xf32>
    tpu.vector_store %arg10[%c0_30, %c0_31], %54 {strides = array<i32>} : memref<16x128xf32, #tpu.memory_space<vmem>>, vector<8x128xf32>,
    %56 = vector.extract_strided_slice %2 {offsets = [8, 0], sizes = [8, 128], strides = [1, 1]} : vector<16x128xf32> to vector<8x128xf32>
    %57 = vector.extract_strided_slice %4 {offsets = [64, 0], sizes = [64, 128], strides = [1, 1]} : vector<128x128xf32> to vector<64x128xf32>
    %58 = vector.extract_strided_slice %6 {offsets = [8, 0], sizes = [8, 1], strides = [1, 1]} : vector<16x1xf32> to vector<8x1xf32>
    %59 = vector.extract_strided_slice %8 {offsets = [64, 0], sizes = [64, 1], strides = [1, 1]} : vector<128x1xf32> to vector<64x1xf32>
    %60 = vector.extract_strided_slice %14 {offsets = [1, 0, 0], sizes = [1, 8, 8], strides = [1, 1, 1]} : vector<2x8x8xf32> to vector<1x8x8xf32>
    %61 = vector.shape_cast %60 : vector<1x8x8xf32> to vector<8x8xf32>
    %62 = vector.broadcast %59 : vector<64x1xf32> to vector<64x8xf32>
    %63 = arith.mulf %62, %11 : vector<64x8xf32>
    %cst_32 = arith.constant dense<0.000000e+00> : vector<8x8xf32>
    %64 = tpu.matmul %9, %63, %cst_32 {dimension_numbers = #tpu.dot_dimension_numbers<[1], [0], [0], [1], [0, 0, 1, 1], [], []>} : vector<8x64xf32>, vector<64x8xf32>, vector<8x8xf32> -> vector<8x8xf32>
    %65 = vector.broadcast %58 : vector<8x1xf32> to vector<8x8xf32>
    %66 = arith.addf %65, %64 : vector<8x8xf32>
    %cst_33 = arith.constant 0.000000e+00 : f32
    %67 = vector.broadcast %cst_33 : f32 to vector<8x8xf32>
    %68 = arith.cmpf ogt, %66, %67 : vector<8x8xf32>
    %cst_34 = arith.constant 2.000000e-01 : f32
    %69 = vector.broadcast %cst_34 : f32 to vector<8x8xf32>
    %70 = arith.mulf %69, %66 : vector<8x8xf32>
    %71 = arith.select %68, %66, %70 : vector<8x8xi1>, vector<8x8xf32>
    %72 = arith.mulf %71, %61 : vector<8x8xf32>
    %cst_35 = arith.constant dense<0xFF800000> : vector<8xf32>
    %73 = vector.multi_reduction <maximumf>, %72, %cst_35 [0] : vector<8x8xf32> to vector<8xf32>
    %74 = vector.shape_cast %73 : vector<8xf32> to vector<1x8xf32>
    %75 = vector.broadcast %74 : vector<1x8xf32> to vector<8x8xf32>
    %76 = arith.subf %72, %75 : vector<8x8xf32>
    %77 = math.exp %76 : vector<8x8xf32>
    %cst_36 = arith.constant dense<0.000000e+00> : vector<8xf32>
    %78 = vector.multi_reduction <add>, %77, %cst_36 [0] : vector<8x8xf32> to vector<8xf32>
    %79 = vector.shape_cast %78 : vector<8xf32> to vector<1x8xf32>
    %80 = tpu.reciprocal %79 {approx = true} : vector<1x8xf32> -> vector<1x8xf32>
    %81 = vector.broadcast %80 : vector<1x8xf32> to vector<8x8xf32>
    %82 = arith.mulf %77, %81 : vector<8x8xf32>
    %83 = arith.mulf %82, %61 : vector<8x8xf32>
    %cst_37 = arith.constant dense<0.000000e+00> : vector<8x64xf32>
    %84 = tpu.matmul %83, %10, %cst_37 {dimension_numbers = #tpu.dot_dimension_numbers<[1], [0], [0], [1], [0, 0, 1, 1], [], []>} : vector<8x8xf32>, vector<8x64xf32>, vector<8x64xf32> -> vector<8x64xf32>
    %85 = arith.mulf %9, %84 : vector<8x64xf32>
    %cst_38 = arith.constant dense<0.000000e+00> : vector<8x128xf32>
    %86 = tpu.matmul %85, %57, %cst_38 {dimension_numbers = #tpu.dot_dimension_numbers<[1], [0], [0], [1], [0, 0, 1, 1], [], []>} : vector<8x64xf32>, vector<64x128xf32>, vector<8x128xf32> -> vector<8x128xf32>
    %87 = arith.addf %56, %86 : vector<8x128xf32>
    %cst_39 = arith.constant 0.000000e+00 : f32
    %88 = vector.broadcast %cst_39 : f32 to vector<8x128xf32>
    %89 = arith.cmpf ogt, %87, %88 : vector<8x128xf32>
    %cst_40 = arith.constant 0.000000e+00 : f32
    %90 = vector.broadcast %cst_40 : f32 to vector<8x128xf32>
    %91 = arith.minimumf %87, %90 : vector<8x128xf32>
    %92 = math.exp %91 : vector<8x128xf32>
    %cst_41 = arith.constant 1.000000e+00 : f32
    %93 = vector.broadcast %cst_41 : f32 to vector<8x128xf32>
    %94 = arith.subf %92, %93 : vector<8x128xf32>
    %95 = arith.select %89, %87, %94 : vector<8x128xi1>, vector<8x128xf32>
    %c8 = arith.constant 8 : index
    %c0_42 = arith.constant 0 : index
    %96 = vector.load %arg10[%c8, %c0_42] : memref<16x128xf32, #tpu.memory_space<vmem>>, vector<8x128xf32>
    tpu.vector_store %arg10[%c8, %c0_42], %95 {strides = array<i32>} : memref<16x128xf32, #tpu.memory_space<vmem>>, vector<8x128xf32>,
    return
  }
  func.func @transform_0(%arg0: i32) -> (i32, i32) {
    %c0_i32 = arith.constant 0 : i32
    %c0_i32_0 = arith.constant 0 : i32
    return %arg0, %c0_i32 : i32, i32
  }
  func.func @transform_1(%arg0: i32) -> (i32, i32) {
    %c0_i32 = arith.constant 0 : i32
    %c0_i32_0 = arith.constant 0 : i32
    return %arg0, %c0_i32 : i32, i32
  }
  func.func @transform_2(%arg0: i32) -> (i32, i32, i32) {
    %c0_i32 = arith.constant 0 : i32
    %c0_i32_0 = arith.constant 0 : i32
    %c0_i32_1 = arith.constant 0 : i32
    %c0_i32_2 = arith.constant 0 : i32
    return %c0_i32, %c0_i32_0, %c0_i32_1 : i32, i32, i32
  }
  func.func @transform_3(%arg0: i32) -> (i32, i32) {
    %c0_i32 = arith.constant 0 : i32
    %c0_i32_0 = arith.constant 0 : i32
    %c0_i32_1 = arith.constant 0 : i32
    return %c0_i32, %c0_i32_0 : i32, i32
  }
  func.func @transform_4(%arg0: i32) -> (i32, i32) {
    %c0_i32 = arith.constant 0 : i32
    %c0_i32_0 = arith.constant 0 : i32
    %c0_i32_1 = arith.constant 0 : i32
    return %c0_i32, %c0_i32_0 : i32, i32
  }
  func.func @transform_5(%arg0: i32) -> (i32, i32) {
    %c0_i32 = arith.constant 0 : i32
    %c0_i32_0 = arith.constant 0 : i32
    %c0_i32_1 = arith.constant 0 : i32
    return %c0_i32, %c0_i32_0 : i32, i32
  }
  func.func @transform_6(%arg0: i32) -> (i32, i32) {
    %c0_i32 = arith.constant 0 : i32
    %c0_i32_0 = arith.constant 0 : i32
    %c0_i32_1 = arith.constant 0 : i32
    return %c0_i32, %c0_i32_0 : i32, i32
  }
  func.func @transform_7(%arg0: i32) -> (i32, i32) {
    %c0_i32 = arith.constant 0 : i32
    %c0_i32_0 = arith.constant 0 : i32
    %c0_i32_1 = arith.constant 0 : i32
    return %c0_i32, %c0_i32_0 : i32, i32
  }
  func.func @transform_8(%arg0: i32) -> (i32, i32) {
    %c0_i32 = arith.constant 0 : i32
    %c0_i32_0 = arith.constant 0 : i32
    %c0_i32_1 = arith.constant 0 : i32
    return %c0_i32, %c0_i32_0 : i32, i32
  }
  func.func @transform_9(%arg0: i32) -> (i32, i32) {
    %c0_i32 = arith.constant 0 : i32
    %c0_i32_0 = arith.constant 0 : i32
    return %arg0, %c0_i32 : i32, i32
  }
}

</mosaic_0001>

<llo_original>
// kernel: tpu_custom_call.1
$region0: #{tpu_custom_call.1}
  #allocation0 [shape = 'u32[]', space=smem, size = 0x4, offset = 0x4, fixed_abs, tag = 'smem constant byte address 0x4 - core index']
  #allocation1 [shape = 'u32[72,128]{1,0:T(1,128)}', space=vmem, size = 0x9000, scoped, tag = 'internal scratch']
  %s0 = inlined_call_operand.vmem [shape: f32[32,16], index: 0, kind: input, shape index: {}]
  %s1 = inlined_call_operand.vmem [shape: f32[256,16], index: 1, kind: input, shape index: {}]
  %s2 = inlined_call_operand.vmem [shape: f32[4,8,8], index: 2, kind: input, shape index: {}]
  %s3 = inlined_call_operand.vmem [shape: f32[16,128], index: 3, kind: input, shape index: {}]
  %s4 = inlined_call_operand.vmem [shape: f32[128,1], index: 4, kind: input, shape index: {}]
  %s5 = inlined_call_operand.vmem [shape: f32[128,1], index: 5, kind: input, shape index: {}]
  %s6 = inlined_call_operand.vmem [shape: f32[8,64], index: 6, kind: input, shape index: {}]
  %s7 = inlined_call_operand.vmem [shape: f32[8,64], index: 7, kind: input, shape index: {}]
  %s8 = inlined_call_operand.vmem [shape: f32[64,8], index: 8, kind: input, shape index: {}]
  %s9 = inlined_call_operand.hbm [shape: f32[32,128], index: 9, kind: output, shape index: {}]
  %s10 = sld [smem:[#allocation0]]
  $region69: #{tpu_custom_call.1} parent=0
    _
  %s12 = ssub.s32 1, %s10
  %s13 = scalar_select 0, %s12, %s10
  $region1: #{tpu_custom_call.1} parent=0
    #allocation2 [shape = 'u8[16384]{0}', space=vmem, size = 0x4000, scoped, tag = 'output window, operand 0']
    #allocation3 [shape = 's32[2]{0}', space=sflag, size = 0x8, scoped, tag = 'scoped memory for tpu_custom_call.1']
    %14 = vsyncpa [#allocation3], 0
    %s15 = scalar_lea.sflag [#allocation3], 1
    %16 = vsyncpa %s15, 0
    loop: start=0, step=1, limit=4
    $region2: #{tpu_custom_call.1} parent=1 // loop_pre_header
      _
    $region3: #{tpu_custom_call.1} parent=1 // loop_header
      %s18 = sphi 0, %s22
      %p19 = scmp.ge.s32.totalorder %s18, 4
      %s28 = sphi 0, %s30
      %s31 = sphi 0, %s28
      %s32 = sphi 0, %s31
      %s48 = sphi 0, %s32
      %s54 = sphi 0, %s56
      %s57 = sphi 0, %s54
      %s58 = sphi 0, %s57
      %s74 = sphi 0, %s58
      %s78 = sphi 0, %s78
      %s80 = sphi 0, %s78
      %s81 = sphi 0, %s80
      %s95 = sphi 0, %s81
      %s99 = sphi 0, %s99
      %s101 = sphi 0, %s99
      %s102 = sphi 0, %s101
      %s116 = sphi 0, %s102
      %s120 = sphi 0, %s120
      %s122 = sphi 0, %s120
      %s123 = sphi 0, %s122
      %s137 = sphi 0, %s123
      %s141 = sphi 0, %s141
      %s143 = sphi 0, %s141
      %s144 = sphi 0, %s143
      %s158 = sphi 0, %s144
      %s162 = sphi 0, %s162
      %s164 = sphi 0, %s162
      %s165 = sphi 0, %s164
      %s179 = sphi 0, %s165
      %s183 = sphi 0, %s183
      %s185 = sphi 0, %s183
      %s186 = sphi 0, %s185
      %s200 = sphi 0, %s186
      %s204 = sphi 0, %s204
      %s206 = sphi 0, %s204
      %s207 = sphi 0, %s206
      %s221 = sphi 0, %s207
      %s227 = sphi 0, %s229
      %s230 = sphi 0, %s227
      %s231 = sphi 0, %s230
      %s247 = sphi 0, %s231
    $region4: #{tpu_custom_call.1} parent=1 // loop_header_branch
      %21 = sbr.rel (%p19) target = $region8
    $region5: #{tpu_custom_call.1} parent=1 // loop_body
      %s23 = ssub.s32 %s18, 1
      %s24 = ssub.s32 %s18, 2
      %s25 = sadd.s32 %s18, 1
      %s26 = ssub.s32 %s18, %s25
      %p27 = scmp.eq.s32.totalorder %s26, 0
      %s29 = sadd.s32 %s28, 1
      %s30 = scalar_select %p27, %s28, %s29
      %p33 = pneg %p27
      %p34 = scmp.eq.s32.totalorder %s18, 1
      %p35 = por %p33, %p34
      %p36 = scmp.ne.s32.totalorder %s28, %s31
      %p37 = scmp.eq.s32.totalorder %s18, 0
      %p38 = por %p36, %p37
      %p39 = scmp.ne.s32.totalorder %s28, %s31
      %p40 = scmp.eq.s32.totalorder %s23, 1
      %p41 = por %p39, %p40
      %p42 = scmp.ne.s32.totalorder %s31, %s32
      %p43 = scmp.eq.s32.totalorder %s23, 0
      %p44 = por %p42, %p43
      %p45 = scmp.ne.s32.totalorder %s31, %s32
      %p46 = scmp.eq.s32.totalorder %s24, 1
      %p47 = por %p45, %p46
      %p49 = scmp.ne.s32.totalorder %s32, %s48
      %p50 = scmp.eq.s32.totalorder %s24, 0
      %p51 = por %p49, %p50
      %s52 = ssub.s32 %s18, %s25
      %p53 = scmp.eq.s32.totalorder %s52, 0
      %s55 = sadd.s32 %s54, 1
      %s56 = scalar_select %p53, %s54, %s55
      %p59 = pneg %p53
      %p60 = scmp.eq.s32.totalorder %s18, 1
      %p61 = por %p59, %p60
      %p62 = scmp.ne.s32.totalorder %s54, %s57
      %p63 = scmp.eq.s32.totalorder %s18, 0
      %p64 = por %p62, %p63
      %p65 = scmp.ne.s32.totalorder %s54, %s57
      %p66 = scmp.eq.s32.totalorder %s23, 1
      %p67 = por %p65, %p66
      %p68 = scmp.ne.s32.totalorder %s57, %s58
      %p69 = scmp.eq.s32.totalorder %s23, 0
      %p70 = por %p68, %p69
      %p71 = scmp.ne.s32.totalorder %s57, %s58
      %p72 = scmp.eq.s32.totalorder %s24, 1
      %p73 = por %p71, %p72
      %p75 = scmp.ne.s32.totalorder %s58, %s74
      %p76 = scmp.eq.s32.totalorder %s24, 0
      %p77 = por %p75, %p76
      %s79 = sadd.s32 %s78, 1
      %p82 = scmp.eq.s32.totalorder %s18, 1
      %p83 = scmp.ne.s32.totalorder %s78, %s80
      %p84 = scmp.eq.s32.totalorder %s18, 0
      %p85 = por %p83, %p84
      %p86 = scmp.ne.s32.totalorder %s78, %s80
      %p87 = scmp.eq.s32.totalorder %s23, 1
      %p88 = por %p86, %p87
      %p89 = scmp.ne.s32.totalorder %s80, %s81
      %p90 = scmp.eq.s32.totalorder %s23, 0
      %p91 = por %p89, %p90
      %p92 = scmp.ne.s32.totalorder %s80, %s81
      %p93 = scmp.eq.s32.totalorder %s24, 1
      %p94 = por %p92, %p93
      %p96 = scmp.ne.s32.totalorder %s81, %s95
      %p97 = scmp.eq.s32.totalorder %s24, 0
      %p98 = por %p96, %p97
      %s100 = sadd.s32 %s99, 1
      %p103 = scmp.eq.s32.totalorder %s18, 1
      %p104 = scmp.ne.s32.totalorder %s99, %s101
      %p105 = scmp.eq.s32.totalorder %s18, 0
      %p106 = por %p104, %p105
      %p107 = scmp.ne.s32.totalorder %s99, %s101
      %p108 = scmp.eq.s32.totalorder %s23, 1
      %p109 = por %p107, %p108
      %p110 = scmp.ne.s32.totalorder %s101, %s102
      %p111 = scmp.eq.s32.totalorder %s23, 0
      %p112 = por %p110, %p111
      %p113 = scmp.ne.s32.totalorder %s101, %s102
      %p114 = scmp.eq.s32.totalorder %s24, 1
      %p115 = por %p113, %p114
      %p117 = scmp.ne.s32.totalorder %s102, %s116
      %p118 = scmp.eq.s32.totalorder %s24, 0
      %p119 = por %p117, %p118
      %s121 = sadd.s32 %s120, 1
      %p124 = scmp.eq.s32.totalorder %s18, 1
      %p125 = scmp.ne.s32.totalorder %s120, %s122
      %p126 = scmp.eq.s32.totalorder %s18, 0
      %p127 = por %p125, %p126
      %p128 = scmp.ne.s32.totalorder %s120, %s122
      %p129 = scmp.eq.s32.totalorder %s23, 1
      %p130 = por %p128, %p129
      %p131 = scmp.ne.s32.totalorder %s122, %s123
      %p132 = scmp.eq.s32.totalorder %s23, 0
      %p133 = por %p131, %p132
      %p134 = scmp.ne.s32.totalorder %s122, %s123
      %p135 = scmp.eq.s32.totalorder %s24, 1
      %p136 = por %p134, %p135
      %p138 = scmp.ne.s32.totalorder %s123, %s137
      %p139 = scmp.eq.s32.totalorder %s24, 0
      %p140 = por %p138, %p139
      %s142 = sadd.s32 %s141, 1
      %p145 = scmp.eq.s32.totalorder %s18, 1
      %p146 = scmp.ne.s32.totalorder %s141, %s143
      %p147 = scmp.eq.s32.totalorder %s18, 0
      %p148 = por %p146, %p147
      %p149 = scmp.ne.s32.totalorder %s141, %s143
      %p150 = scmp.eq.s32.totalorder %s23, 1
      %p151 = por %p149, %p150
      %p152 = scmp.ne.s32.totalorder %s143, %s144
      %p153 = scmp.eq.s32.totalorder %s23, 0
      %p154 = por %p152, %p153
      %p155 = scmp.ne.s32.totalorder %s143, %s144
      %p156 = scmp.eq.s32.totalorder %s24, 1
      %p157 = por %p155, %p156
      %p159 = scmp.ne.s32.totalorder %s144, %s158
      %p160 = scmp.eq.s32.totalorder %s24, 0
      %p161 = por %p159, %p160
      %s163 = sadd.s32 %s162, 1
      %p166 = scmp.eq.s32.totalorder %s18, 1
      %p167 = scmp.ne.s32.totalorder %s162, %s164
      %p168 = scmp.eq.s32.totalorder %s18, 0
      %p169 = por %p167, %p168
      %p170 = scmp.ne.s32.totalorder %s162, %s164
      %p171 = scmp.eq.s32.totalorder %s23, 1
      %p172 = por %p170, %p171
      %p173 = scmp.ne.s32.totalorder %s164, %s165
      %p174 = scmp.eq.s32.totalorder %s23, 0
      %p175 = por %p173, %p174
      %p176 = scmp.ne.s32.totalorder %s164, %s165
      %p177 = scmp.eq.s32.totalorder %s24, 1
      %p178 = por %p176, %p177
      %p180 = scmp.ne.s32.totalorder %s165, %s179
      %p181 = scmp.eq.s32.totalorder %s24, 0
      %p182 = por %p180, %p181
      %s184 = sadd.s32 %s183, 1
      %p187 = scmp.eq.s32.totalorder %s18, 1
      %p188 = scmp.ne.s32.totalorder %s183, %s185
      %p189 = scmp.eq.s32.totalorder %s18, 0
      %p190 = por %p188, %p189
      %p191 = scmp.ne.s32.totalorder %s183, %s185
      %p192 = scmp.eq.s32.totalorder %s23, 1
      %p193 = por %p191, %p192
      %p194 = scmp.ne.s32.totalorder %s185, %s186
      %p195 = scmp.eq.s32.totalorder %s23, 0
      %p196 = por %p194, %p195
      %p197 = scmp.ne.s32.totalorder %s185, %s186
      %p198 = scmp.eq.s32.totalorder %s24, 1
      %p199 = por %p197, %p198
      %p201 = scmp.ne.s32.totalorder %s186, %s200
      %p202 = scmp.eq.s32.totalorder %s24, 0
      %p203 = por %p201, %p202
      %s205 = sadd.s32 %s204, 1
      %p208 = scmp.eq.s32.totalorder %s18, 1
      %p209 = scmp.ne.s32.totalorder %s204, %s206
      %p210 = scmp.eq.s32.totalorder %s18, 0
      %p211 = por %p209, %p210
      %p212 = scmp.ne.s32.totalorder %s204, %s206
      %p213 = scmp.eq.s32.totalorder %s23, 1
      %p214 = por %p212, %p213
      %p215 = scmp.ne.s32.totalorder %s206, %s207
      %p216 = scmp.eq.s32.totalorder %s23, 0
      %p217 = por %p215, %p216
      %p218 = scmp.ne.s32.totalorder %s206, %s207
      %p219 = scmp.eq.s32.totalorder %s24, 1
      %p220 = por %p218, %p219
      %p222 = scmp.ne.s32.totalorder %s207, %s221
      %p223 = scmp.eq.s32.totalorder %s24, 0
      %p224 = por %p222, %p223
      %s225 = ssub.s32 %s18, %s25
      %p226 = scmp.eq.s32.totalorder %s225, 0
      %s228 = sadd.s32 %s227, 1
      %s229 = scalar_select %p226, %s227, %s228
      %p232 = pneg %p226
      %p233 = scmp.eq.s32.totalorder %s18, 1
      %p234 = por %p232, %p233
      %p235 = scmp.ne.s32.totalorder %s227, %s230
      %p236 = scmp.eq.s32.totalorder %s18, 0
      %p237 = por %p235, %p236
      %p238 = scmp.ne.s32.totalorder %s227, %s230
      %p239 = scmp.eq.s32.totalorder %s23, 1
      %p240 = por %p238, %p239
      %p241 = scmp.ne.s32.totalorder %s230, %s231
      %p242 = scmp.eq.s32.totalorder %s23, 0
      %p243 = por %p241, %p242
      %p244 = scmp.ne.s32.totalorder %s230, %s231
      %p245 = scmp.eq.s32.totalorder %s24, 1
      %p246 = por %p244, %p245
      %p248 = scmp.ne.s32.totalorder %s231, %s247
      %p249 = scmp.eq.s32.totalorder %s24, 0
      %p250 = por %p248, %p249
      %p251 = scmp.le.s32.totalorder 1, %s18
      %p252 = scmp.lt.s32.totalorder %s18, 3
      %p253 = pnand %p251, %p252
      %p254 = pneg %p253
      // Predicated region
      $region9: #{tpu_custom_call.1} parent=5 // pred_check
        _
      $region10: #{tpu_custom_call.1} parent=5 // pred_check_branch
        %256 = sbr.rel (%p253) target = $region12
      $region11: #{tpu_custom_call.1} parent=5 // pred_region
        %s257 = ssub.s32 %s18, 1
        // Predicated region
        $region13: #{tpu_custom_call.1} parent=11 // pred_check
          %p258 = pneg %p91
        $region14: #{tpu_custom_call.1} parent=11 // pred_check_branch
          %260 = sbr.rel (%p258) target = $region16
        $region15: #{tpu_custom_call.1} parent=11 // pred_region
          _
        $region16: #{tpu_custom_call.1} parent=11 // pred_fallthru
          _
        // Predicated region
        $region17: #{tpu_custom_call.1} parent=11 // pred_check
          %p261 = pneg %p112
        $region18: #{tpu_custom_call.1} parent=11 // pred_check_branch
          %263 = sbr.rel (%p261) target = $region20
        $region19: #{tpu_custom_call.1} parent=11 // pred_region
          _
        $region20: #{tpu_custom_call.1} parent=11 // pred_fallthru
          _
        // Predicated region
        $region21: #{tpu_custom_call.1} parent=11 // pred_check
          %p264 = pneg %p133
        $region22: #{tpu_custom_call.1} parent=11 // pred_check_branch
          %266 = sbr.rel (%p264) target = $region24
        $region23: #{tpu_custom_call.1} parent=11 // pred_region
          _
        $region24: #{tpu_custom_call.1} parent=11 // pred_fallthru
          _
        // Predicated region
        $region25: #{tpu_custom_call.1} parent=11 // pred_check
          %p267 = pneg %p154
        $region26: #{tpu_custom_call.1} parent=11 // pred_check_branch
          %269 = sbr.rel (%p267) target = $region28
        $region27: #{tpu_custom_call.1} parent=11 // pred_region
          _
        $region28: #{tpu_custom_call.1} parent=11 // pred_fallthru
          _
        // Predicated region
        $region29: #{tpu_custom_call.1} parent=11 // pred_check
          %p270 = pneg %p175
        $region30: #{tpu_custom_call.1} parent=11 // pred_check_branch
          %272 = sbr.rel (%p270) target = $region32
        $region31: #{tpu_custom_call.1} parent=11 // pred_region
          _
        $region32: #{tpu_custom_call.1} parent=11 // pred_fallthru
          _
        // Predicated region
        $region33: #{tpu_custom_call.1} parent=11 // pred_check
          %p273 = pneg %p196
        $region34: #{tpu_custom_call.1} parent=11 // pred_check_branch
          %275 = sbr.rel (%p273) target = $region36
        $region35: #{tpu_custom_call.1} parent=11 // pred_region
          _
        $region36: #{tpu_custom_call.1} parent=11 // pred_fallthru
          _
        // Predicated region
        $region37: #{tpu_custom_call.1} parent=11 // pred_check
          %p276 = pneg %p217
        $region38: #{tpu_custom_call.1} parent=11 // pred_check_branch
          %278 = sbr.rel (%p276) target = $region40
        $region39: #{tpu_custom_call.1} parent=11 // pred_region
          _
        $region40: #{tpu_custom_call.1} parent=11 // pred_fallthru
          _
      $region12: #{tpu_custom_call.1} parent=5 // pred_fallthru
        _
      %p279 = scmp.lt.s32.totalorder %s18, 2
      // Predicated region
      $region41: #{tpu_custom_call.1} parent=5 // pred_check
        %p280 = pneg %p279
      $region42: #{tpu_custom_call.1} parent=5 // pred_check_branch
        %282 = sbr.rel (%p280) target = $region44
      $region43: #{tpu_custom_call.1} parent=5 // pred_region
        // Predicated region
        $region45: #{tpu_custom_call.1} parent=43 // pred_check
          %p283 = pneg %p38
        $region46: #{tpu_custom_call.1} parent=43 // pred_check_branch
          %285 = sbr.rel (%p283) target = $region48
        $region47: #{tpu_custom_call.1} parent=43 // pred_region
          %s286 = smul.u32 2, %s18
          %p287 = scmp.lt.s32.totalorder %s286, 3
          %s288 = scalar_select %p287, %s286, 3
          %s289 = smul.addr %s288, 8
          %s290 = scalar_lea.vmem %s0, %s289
          %s291 = smul.u32 2, %s18
        $region48: #{tpu_custom_call.1} parent=43 // pred_fallthru
          _
        // Predicated region
        $region49: #{tpu_custom_call.1} parent=43 // pred_check
          %p292 = pneg %p64
        $region50: #{tpu_custom_call.1} parent=43 // pred_check_branch
          %294 = sbr.rel (%p292) target = $region52
        $region51: #{tpu_custom_call.1} parent=43 // pred_region
          %s295 = smul.u32 16, %s18
          %p296 = scmp.lt.s32.totalorder %s295, 31
          %s297 = scalar_select %p296, %s295, 31
          %s298 = smul.addr %s297, 8
          %s299 = scalar_lea.vmem %s1, %s298
          %s300 = smul.u32 16, %s18
        $region52: #{tpu_custom_call.1} parent=43 // pred_fallthru
          _
      $region44: #{tpu_custom_call.1} parent=5 // pred_fallthru
        _
      %p301 = scmp.le.s32.totalorder 1, %s18
      %p302 = scmp.lt.s32.totalorder %s18, 3
      %p303 = pnand %p301, %p302
      %p304 = pneg %p303
      // Predicated region
      $region53: #{tpu_custom_call.1} parent=5 // pred_check
        _
      $region54: #{tpu_custom_call.1} parent=5 // pred_check_branch
        %306 = sbr.rel (%p303) target = $region56
      $region55: #{tpu_custom_call.1} parent=5 // pred_region
        %s307 = ssub.s32 %s18, 1
        %s308 = smul.u32 2, %s23
        %p309 = scmp.lt.s32.totalorder %s308, 3
        %s310 = scalar_select %p309, %s308, 3
        %s311 = smul.addr %s310, 8
        %s312 = scalar_lea.vmem %s0, %s311
        %p313 = pneg %p44
        %p314 = pneg %p41
        %s315 = smul.u32 16, %s23
        %p316 = scmp.lt.s32.totalorder %s315, 31
        %s317 = scalar_select %p316, %s315, 31
        %s318 = smul.addr %s317, 8
        %s319 = scalar_lea.vmem %s1, %s318
        %p320 = pneg %p70
        %p321 = pneg %p67
        %p322 = pneg %p91
        %p323 = pneg %p88
        %p324 = pneg %p112
        %p325 = pneg %p109
        %p326 = pneg %p133
        %p327 = pneg %p130
        %p328 = pneg %p154
        %p329 = pneg %p151
        %p330 = pneg %p175
        %p331 = pneg %p172
        %p332 = pneg %p196
        %p333 = pneg %p193
        %p334 = pneg %p217
        %p335 = pneg %p214
        %p336 = pneg %p243
        %p337 = pneg %p240
        %s338 = sand.u32 %s230, 1
        %s339 = scalar_lea.sflag [#allocation3], %s338
        %s340 = sand.u32 %s230, 1
        %s341 = smul.addr %s340, 16
        %s342 = scalar_lea.vmem [#allocation2], %s341
        %s343 = smul.u32 2, %s23
        %p344 = scmp.lt.s32.totalorder %s343, 3
        %s345 = scalar_select %p344, %s343, 3
        %s346 = smul.addr %s345, 8
        %s347 = scalar_lea.vmem %s0, %s346
        %s348 = smul.u32 2, %s23
        %s349 = smul.u32 16, %s23
        %p350 = scmp.lt.s32.totalorder %s349, 31
        %s351 = scalar_select %p350, %s349, 31
        %s352 = smul.addr %s351, 8
        %s353 = scalar_lea.vmem %s1, %s352
        %s354 = smul.u32 16, %s23
        %s355 = smul.u32 2, %s23
        %v356 = vld [vmem:[%s3] sm:$0xff]
        %v357 = vld [vmem:[%s3 + $0x8] sm:$0xff]
        %v358 = vld [vmem:[%s347] sm:$0xff]
        %v359 = vld [vmem:[%s347 + $0x8] sm:$0xff]
        %vm360 = vcmask 130048
        %v362 = vsel %vm360, %v358, 0
        %v365 = vsel %vm360, %v359, 0
        %367 = vmatpush.msra.mxu0 0.0
        %368 = vmatpush.msra.mxu0 0.0
        %369 = vmatpush.msra.mxu0 0.0
        %370 = vmatpush.msra.mxu0 0.0
        %371 = vmatpush.msra.mxu0 0.0
        %372 = vmatpush.msra.mxu0 0.0
        %373 = vmatpush.msra.mxu0 0.0
        %374 = vmatpush.msra.mxu0 0.0
        %375 = vmatpush.msra.mxu0 0.0
        %376 = vmatpush.msra.mxu0 0.0
        %377 = vmatpush.msra.mxu0 0.0
        %378 = vmatpush.msra.mxu0 0.0
        %379 = vmatpush.msra.mxu0 0.0
        %380 = vmatpush.msra.mxu0 0.0
        %381 = vmatpush.msra.mxu0 %v357
        %382 = vmatpush.msra.mxu0 %v356
        %383 = vmatmul.f32.gmra.mxu0 %v362
        %v384 = vpop.f32.mrf.mxu0
        %v385 = vadd.f32 0.0, %v384
        %386 = vmatmul.f32.gmra.mxu0 %v365
        %v387 = vpop.f32.mrf.mxu0
        %v388 = vadd.f32 0.0, %v387
        %389 = vdwg.mxu0
        %v390 = vld [vmem:[%s353] sm:$0xff]
        %v391 = vld [vmem:[%s353 + $0x8] sm:$0xff]
        %v392 = vld [vmem:[%s353 + $0x10] sm:$0xff]
        %v393 = vld [vmem:[%s353 + $0x18] sm:$0xff]
        %v394 = vld [vmem:[%s353 + $0x20] sm:$0xff]
        %v395 = vld [vmem:[%s353 + $0x28] sm:$0xff]
        %v396 = vld [vmem:[%s353 + $0x30] sm:$0xff]
        %v397 = vld [vmem:[%s353 + $0x38] sm:$0xff]
        %v398 = vld [vmem:[%s353 + $0x40] sm:$0xff]
        %v399 = vld [vmem:[%s353 + $0x48] sm:$0xff]
        %v400 = vld [vmem:[%s353 + $0x50] sm:$0xff]
        %v401 = vld [vmem:[%s353 + $0x58] sm:$0xff]
        %v402 = vld [vmem:[%s353 + $0x60] sm:$0xff]
        %v403 = vld [vmem:[%s353 + $0x68] sm:$0xff]
        %v404 = vld [vmem:[%s353 + $0x70] sm:$0xff]
        %v405 = vld [vmem:[%s353 + $0x78] sm:$0xff]
        %v407 = vsel %vm360, %v390, 0
        %v410 = vsel %vm360, %v391, 0
        %v413 = vsel %vm360, %v392, 0
        %v416 = vsel %vm360, %v393, 0
        %v419 = vsel %vm360, %v394, 0
        %v422 = vsel %vm360, %v395, 0
        %v425 = vsel %vm360, %v396, 0
        %v428 = vsel %vm360, %v397, 0
        %v431 = vsel %vm360, %v398, 0
        %v434 = vsel %vm360, %v399, 0
        %v437 = vsel %vm360, %v400, 0
        %v440 = vsel %vm360, %v401, 0
        %v443 = vsel %vm360, %v402, 0
        %v446 = vsel %vm360, %v403, 0
        %v449 = vsel %vm360, %v404, 0
        %v452 = vsel %vm360, %v405, 0
        %454 = vmatpush.msra.mxu0 0.0
        %455 = vmatpush.msra.mxu0 0.0
        %456 = vmatpush.msra.mxu0 0.0
        %457 = vmatpush.msra.mxu0 0.0
        %458 = vmatpush.msra.mxu0 0.0
        %459 = vmatpush.msra.mxu0 0.0
        %460 = vmatpush.msra.mxu0 0.0
        %461 = vmatpush.msra.mxu0 0.0
        %462 = vmatpush.msra.mxu0 0.0
        %463 = vmatpush.msra.mxu0 0.0
        %464 = vmatpush.msra.mxu0 0.0
        %465 = vmatpush.msra.mxu0 0.0
        %466 = vmatpush.msra.mxu0 0.0
        %467 = vmatpush.msra.mxu0 0.0
        %468 = vmatpush.msra.mxu0 %v357
        %469 = vmatpush.msra.mxu0 %v356
        %470 = vmatmul.f32.gmra.mxu0 %v407
        %v471 = vpop.f32.mrf.mxu0
        %v472 = vadd.f32 0.0, %v471
        %473 = vmatmul.f32.gmra.mxu0 %v410
        %v474 = vpop.f32.mrf.mxu0
        %v475 = vadd.f32 0.0, %v474
        %476 = vmatmul.f32.gmra.mxu0 %v413
        %v477 = vpop.f32.mrf.mxu0
        %v478 = vadd.f32 0.0, %v477
        %479 = vmatmul.f32.gmra.mxu0 %v416
        %v480 = vpop.f32.mrf.mxu0
        %v481 = vadd.f32 0.0, %v480
        %482 = vmatmul.f32.gmra.mxu0 %v419
        %v483 = vpop.f32.mrf.mxu0
        %v484 = vadd.f32 0.0, %v483
        %485 = vmatmul.f32.gmra.mxu0 %v422
        %v486 = vpop.f32.mrf.mxu0
        %v487 = vadd.f32 0.0, %v486
        %488 = vmatmul.f32.gmra.mxu0 %v425
        %v489 = vpop.f32.mrf.mxu0
        %v490 = vadd.f32 0.0, %v489
        %491 = vmatmul.f32.gmra.mxu0 %v428
        %v492 = vpop.f32.mrf.mxu0
        %v493 = vadd.f32 0.0, %v492
        %494 = vmatmul.f32.gmra.mxu0 %v431
        %v495 = vpop.f32.mrf.mxu0
        %v496 = vadd.f32 0.0, %v495
        %497 = vmatmul.f32.gmra.mxu0 %v434
        %v498 = vpop.f32.mrf.mxu0
        %v499 = vadd.f32 0.0, %v498
        %500 = vmatmul.f32.gmra.mxu0 %v437
        %v501 = vpop.f32.mrf.mxu0
        %v502 = vadd.f32 0.0, %v501
        %503 = vmatmul.f32.gmra.mxu0 %v440
        %v504 = vpop.f32.mrf.mxu0
        %v505 = vadd.f32 0.0, %v504
        %506 = vmatmul.f32.gmra.mxu0 %v443
        %v507 = vpop.f32.mrf.mxu0
        %v508 = vadd.f32 0.0, %v507
        %509 = vmatmul.f32.gmra.mxu0 %v446
        %v510 = vpop.f32.mrf.mxu0
        %v511 = vadd.f32 0.0, %v510
        %512 = vmatmul.f32.gmra.mxu0 %v449
        %v513 = vpop.f32.mrf.mxu0
        %v514 = vadd.f32 0.0, %v513
        %515 = vmatmul.f32.gmra.mxu0 %v452
        %v516 = vpop.f32.mrf.mxu0
        %v517 = vadd.f32 0.0, %v516
        %518 = vdwg.mxu0
        %v519 = vld [vmem:[%s4] sm:$0xff]
        %v520 = vld [vmem:[%s4 + $0x8] sm:$0xff]
        %v521 = vld [vmem:[%s4 + $0x10] sm:$0xff]
        %v522 = vld [vmem:[%s4 + $0x18] sm:$0xff]
        %v523 = vld [vmem:[%s4 + $0x20] sm:$0xff]
        %v524 = vld [vmem:[%s4 + $0x28] sm:$0xff]
        %v525 = vld [vmem:[%s4 + $0x30] sm:$0xff]
        %v526 = vld [vmem:[%s4 + $0x38] sm:$0xff]
        %v527 = vld [vmem:[%s4 + $0x40] sm:$0xff]
        %v528 = vld [vmem:[%s4 + $0x48] sm:$0xff]
        %v529 = vld [vmem:[%s4 + $0x50] sm:$0xff]
        %v530 = vld [vmem:[%s4 + $0x58] sm:$0xff]
        %v531 = vld [vmem:[%s4 + $0x60] sm:$0xff]
        %v532 = vld [vmem:[%s4 + $0x68] sm:$0xff]
        %v533 = vld [vmem:[%s4 + $0x70] sm:$0xff]
        %v534 = vld [vmem:[%s4 + $0x78] sm:$0xff]
        %535 = vmatpush.msra.mxu0 %v534
        %536 = vmatpush.msra.mxu0 %v533
        %537 = vmatpush.msra.mxu0 %v532
        %538 = vmatpush.msra.mxu0 %v531
        %539 = vmatpush.msra.mxu0 %v530
        %540 = vmatpush.msra.mxu0 %v529
        %541 = vmatpush.msra.mxu0 %v528
        %542 = vmatpush.msra.mxu0 %v527
        %543 = vmatpush.msra.mxu0 %v526
        %544 = vmatpush.msra.mxu0 %v525
        %545 = vmatpush.msra.mxu0 %v524
        %546 = vmatpush.msra.mxu0 %v523
        %547 = vmatpush.msra.mxu0 %v522
        %548 = vmatpush.msra.mxu0 %v521
        %549 = vmatpush.msra.mxu0 %v520
        %550 = vmatpush.msra.mxu0 %v519
        %551 = vmatmul.f32.gmra.mxu0 %v385
        %v552 = vpop.f32.mrf.mxu0
        %v553 = vadd.f32 0.0, %v552
        %554 = vmatmul.f32.gmra.mxu0 %v388
        %v555 = vpop.f32.mrf.mxu0
        %v556 = vadd.f32 0.0, %v555
        %557 = vdwg.mxu0
        %v558 = vld [vmem:[%s5] sm:$0xff]
        %v559 = vld [vmem:[%s5 + $0x8] sm:$0xff]
        %v560 = vld [vmem:[%s5 + $0x10] sm:$0xff]
        %v561 = vld [vmem:[%s5 + $0x18] sm:$0xff]
        %v562 = vld [vmem:[%s5 + $0x20] sm:$0xff]
        %v563 = vld [vmem:[%s5 + $0x28] sm:$0xff]
        %v564 = vld [vmem:[%s5 + $0x30] sm:$0xff]
        %v565 = vld [vmem:[%s5 + $0x38] sm:$0xff]
        %v566 = vld [vmem:[%s5 + $0x40] sm:$0xff]
        %v567 = vld [vmem:[%s5 + $0x48] sm:$0xff]
        %v568 = vld [vmem:[%s5 + $0x50] sm:$0xff]
        %v569 = vld [vmem:[%s5 + $0x58] sm:$0xff]
        %v570 = vld [vmem:[%s5 + $0x60] sm:$0xff]
        %v571 = vld [vmem:[%s5 + $0x68] sm:$0xff]
        %v572 = vld [vmem:[%s5 + $0x70] sm:$0xff]
        %v573 = vld [vmem:[%s5 + $0x78] sm:$0xff]
        %574 = vmatpush.msra.mxu0 %v573
        %575 = vmatpush.msra.mxu0 %v572
        %576 = vmatpush.msra.mxu0 %v571
        %577 = vmatpush.msra.mxu0 %v570
        %578 = vmatpush.msra.mxu0 %v569
        %579 = vmatpush.msra.mxu0 %v568
        %580 = vmatpush.msra.mxu0 %v567
        %581 = vmatpush.msra.mxu0 %v566
        %582 = vmatpush.msra.mxu0 %v565
        %583 = vmatpush.msra.mxu0 %v564
        %584 = vmatpush.msra.mxu0 %v563
        %585 = vmatpush.msra.mxu0 %v562
        %586 = vmatpush.msra.mxu0 %v561
        %587 = vmatpush.msra.mxu0 %v560
        %588 = vmatpush.msra.mxu0 %v559
        %589 = vmatpush.msra.mxu0 %v558
        %590 = vmatmul.f32.gmra.mxu0 %v472
        %v591 = vpop.f32.mrf.mxu0
        %v592 = vadd.f32 0.0, %v591
        %593 = vmatmul.f32.gmra.mxu0 %v475
        %v594 = vpop.f32.mrf.mxu0
        %v595 = vadd.f32 0.0, %v594
        %596 = vmatmul.f32.gmra.mxu0 %v478
        %v597 = vpop.f32.mrf.mxu0
        %v598 = vadd.f32 0.0, %v597
        %599 = vmatmul.f32.gmra.mxu0 %v481
        %v600 = vpop.f32.mrf.mxu0
        %v601 = vadd.f32 0.0, %v600
        %602 = vmatmul.f32.gmra.mxu0 %v484
        %v603 = vpop.f32.mrf.mxu0
        %v604 = vadd.f32 0.0, %v603
        %605 = vmatmul.f32.gmra.mxu0 %v487
        %v606 = vpop.f32.mrf.mxu0
        %v607 = vadd.f32 0.0, %v606
        %608 = vmatmul.f32.gmra.mxu0 %v490
        %v609 = vpop.f32.mrf.mxu0
        %v610 = vadd.f32 0.0, %v609
        %611 = vmatmul.f32.gmra.mxu0 %v493
        %v612 = vpop.f32.mrf.mxu0
        %v613 = vadd.f32 0.0, %v612
        %614 = vmatmul.f32.gmra.mxu0 %v496
        %v615 = vpop.f32.mrf.mxu0
        %v616 = vadd.f32 0.0, %v615
        %617 = vmatmul.f32.gmra.mxu0 %v499
        %v618 = vpop.f32.mrf.mxu0
        %v619 = vadd.f32 0.0, %v618
        %620 = vmatmul.f32.gmra.mxu0 %v502
        %v621 = vpop.f32.mrf.mxu0
        %v622 = vadd.f32 0.0, %v621
        %623 = vmatmul.f32.gmra.mxu0 %v505
        %v624 = vpop.f32.mrf.mxu0
        %v625 = vadd.f32 0.0, %v624
        %626 = vmatmul.f32.gmra.mxu0 %v508
        %v627 = vpop.f32.mrf.mxu0
        %v628 = vadd.f32 0.0, %v627
        %629 = vmatmul.f32.gmra.mxu0 %v511
        %v630 = vpop.f32.mrf.mxu0
        %v631 = vadd.f32 0.0, %v630
        %632 = vmatmul.f32.gmra.mxu0 %v514
        %v633 = vpop.f32.mrf.mxu0
        %v634 = vadd.f32 0.0, %v633
        %635 = vmatmul.f32.gmra.mxu0 %v517
        %v636 = vpop.f32.mrf.mxu0
        %v637 = vadd.f32 0.0, %v636
        %638 = vdwg.mxu0
        %v639 = vld [vmem:[%s6] sm:$0xff]
        %v640 = vld [vmem:[%s7] sm:$0xff]
        %v641 = vld [vmem:[%s8] sm:$0xff]
        %v642 = vld [vmem:[%s8 + $0x8] sm:$0xff]
        %v643 = vld [vmem:[%s8 + $0x10] sm:$0xff]
        %v644 = vld [vmem:[%s8 + $0x18] sm:$0xff]
        %v645 = vld [vmem:[%s8 + $0x20] sm:$0xff]
        %v646 = vld [vmem:[%s8 + $0x28] sm:$0xff]
        %v647 = vld [vmem:[%s8 + $0x30] sm:$0xff]
        %v648 = vld [vmem:[%s8 + $0x38] sm:$0xff]
        %s649 = smul.u32 %s23, 2
        %s650 = smul.u32 %s649, 8
        %s651 = scalar_lea.vmem %s2, %s650
        %v652 = vld [vmem:[%s651] sm:$0xff]
        %v653 = vld [vmem:[%s651 + $0x8] sm:$0xff]
        %655 = vset.pattern.permute.xlu0 0
        %656 = vperm.xlu0 %655, %v592
        %v657 = vpop.permute.xlu0 %656
        %660 = vset.pattern.permute.xlu0 0
        %661 = vperm.xlu0 %660, %v595
        %v662 = vpop.permute.xlu0 %661
        %665 = vset.pattern.permute.xlu0 0
        %666 = vperm.xlu0 %665, %v598
        %v667 = vpop.permute.xlu0 %666
        %670 = vset.pattern.permute.xlu0 0
        %671 = vperm.xlu0 %670, %v601
        %v672 = vpop.permute.xlu0 %671
        %675 = vset.pattern.permute.xlu0 0
        %676 = vperm.xlu0 %675, %v604
        %v677 = vpop.permute.xlu0 %676
        %680 = vset.pattern.permute.xlu0 0
        %681 = vperm.xlu0 %680, %v607
        %v682 = vpop.permute.xlu0 %681
        %685 = vset.pattern.permute.xlu0 0
        %686 = vperm.xlu0 %685, %v610
        %v687 = vpop.permute.xlu0 %686
        %690 = vset.pattern.permute.xlu0 0
        %691 = vperm.xlu0 %690, %v613
        %v692 = vpop.permute.xlu0 %691
        %v694 = vmul.f32 %v657, %v641
        %v695 = vmul.f32 %v662, %v642
        %v696 = vmul.f32 %v667, %v643
        %v697 = vmul.f32 %v672, %v644
        %v698 = vmul.f32 %v677, %v645
        %v699 = vmul.f32 %v682, %v646
        %v700 = vmul.f32 %v687, %v647
        %v701 = vmul.f32 %v692, %v648
        %vm702 = vcmask 523264
        %v704 = vsel %vm702, %v639, 0
        %706 = vmatpush.msra.mxu0 0.0
        %707 = vmatpush.msra.mxu0 0.0
        %708 = vmatpush.msra.mxu0 0.0
        %709 = vmatpush.msra.mxu0 0.0
        %710 = vmatpush.msra.mxu0 0.0
        %711 = vmatpush.msra.mxu0 0.0
        %712 = vmatpush.msra.mxu0 0.0
        %713 = vmatpush.msra.mxu0 0.0
        %714 = vmatpush.msra.mxu0 %v701
        %715 = vmatpush.msra.mxu0 %v700
        %716 = vmatpush.msra.mxu0 %v699
        %717 = vmatpush.msra.mxu0 %v698
        %718 = vmatpush.msra.mxu0 %v697
        %719 = vmatpush.msra.mxu0 %v696
        %720 = vmatpush.msra.mxu0 %v695
        %721 = vmatpush.msra.mxu0 %v694
        %722 = vmatmul.f32.gmra.mxu0 %v704
        %v723 = vpop.f32.mrf.mxu0
        %v724 = vadd.f32 0.0, %v723
        %725 = vdwg.mxu0
        %727 = vset.pattern.permute.xlu0 0
        %728 = vperm.xlu0 %727, %v553
        %v729 = vpop.permute.xlu0 %728
        %v731 = vadd.f32 %v729, %v724
        %vm732 = vcmp.gt.f32.partialorder %v731, 0.0
        %v733 = vmul.f32 %v731, 0.2
        %v734 = vsel %vm732, %v731, %v733
        %v735 = vmul.f32 %v734, %v652
        %vm736 = vcmask 64512
        %v737 = vsel %vm736, %v735, -inf
        %v738 = vrot.slane %v737, 4
        %v739 = vmax.f32 %v737, %v738
        %v740 = vrot.slane %v739, 2
        %v741 = vmax.f32 %v739, %v740
        %v742 = vrot.slane %v741, 1
        %v743 = vmax.f32 %v741, %v742
        %v744 = vsub.f32 %v735, %v743
        %v745 = vmul.f32 %v744, 1.442695
        %v746 = vpow.pop %v745
        %v747 = vsel %vm736, %v746, 0.0
        %v748 = vrot.slane %v747, 4
        %v749 = vadd.f32 %v747, %v748
        %v750 = vrot.slane %v749, 2
        %v751 = vadd.f32 %v749, %v750
        %v752 = vrot.slane %v751, 1
        %v753 = vadd.f32 %v751, %v752
        %v754 = vrcp.pop %v753
        %v755 = vmul.f32 %v746, %v754
        %v756 = vmul.f32 %v755, %v652
        %v758 = vsel %vm736, %v756, 0
        %760 = vmatpush.msra.mxu0 0.0
        %761 = vmatpush.msra.mxu0 0.0
        %762 = vmatpush.msra.mxu0 0.0
        %763 = vmatpush.msra.mxu0 0.0
        %764 = vmatpush.msra.mxu0 0.0
        %765 = vmatpush.msra.mxu0 0.0
        %766 = vmatpush.msra.mxu0 0.0
        %767 = vmatpush.msra.mxu0 0.0
        %768 = vmatpush.msra.mxu0 0.0
        %769 = vmatpush.msra.mxu0 0.0
        %770 = vmatpush.msra.mxu0 0.0
        %771 = vmatpush.msra.mxu0 0.0
        %772 = vmatpush.msra.mxu0 0.0
        %773 = vmatpush.msra.mxu0 0.0
        %774 = vmatpush.msra.mxu0 0.0
        %775 = vmatpush.msra.mxu0 %v640
        %776 = vmatmul.f32.gmra.mxu0 %v758
        %v777 = vpop.f32.mrf.mxu0
        %v778 = vadd.f32 0.0, %v777
        %779 = vdwg.mxu0
        %v780 = vmul.f32 %v639, %v778
        %v782 = vsel %vm702, %v780, 0
        %784 = vmatpush.msra.mxu0 0.0
        %785 = vmatpush.msra.mxu0 0.0
        %786 = vmatpush.msra.mxu0 0.0
        %787 = vmatpush.msra.mxu0 0.0
        %788 = vmatpush.msra.mxu0 0.0
        %789 = vmatpush.msra.mxu0 0.0
        %790 = vmatpush.msra.mxu0 0.0
        %791 = vmatpush.msra.mxu0 0.0
        %792 = vmatpush.msra.mxu0 %v493
        %793 = vmatpush.msra.mxu0 %v490
        %794 = vmatpush.msra.mxu0 %v487
        %795 = vmatpush.msra.mxu0 %v484
        %796 = vmatpush.msra.mxu0 %v481
        %797 = vmatpush.msra.mxu0 %v478
        %798 = vmatpush.msra.mxu0 %v475
        %799 = vmatpush.msra.mxu0 %v472
        %800 = vmatmul.f32.gmra.mxu0 %v782
        %v801 = vpop.f32.mrf.mxu0
        %v802 = vadd.f32 0.0, %v801
        %803 = vdwg.mxu0
        %v804 = vadd.f32 %v385, %v802
        %vm805 = vcmp.gt.f32.partialorder %v804, 0.0
        %v806 = vmin.f32 %v804, 0.0
        %v807 = vmul.f32 %v806, 1.442695
        %v808 = vpow.pop %v807
        %v809 = vsub.f32 %v808, 1.0
        %v810 = vsel %vm805, %v804, %v809
        %811 = vst [vmem:[%s342] sm:$0xff] %v810
        %813 = vset.pattern.permute.xlu0 0
        %814 = vperm.xlu0 %813, %v616
        %v815 = vpop.permute.xlu0 %814
        %818 = vset.pattern.permute.xlu0 0
        %819 = vperm.xlu0 %818, %v619
        %v820 = vpop.permute.xlu0 %819
        %823 = vset.pattern.permute.xlu0 0
        %824 = vperm.xlu0 %823, %v622
        %v825 = vpop.permute.xlu0 %824
        %828 = vset.pattern.permute.xlu0 0
        %829 = vperm.xlu0 %828, %v625
        %v830 = vpop.permute.xlu0 %829
        %833 = vset.pattern.permute.xlu0 0
        %834 = vperm.xlu0 %833, %v628
        %v835 = vpop.permute.xlu0 %834
        %838 = vset.pattern.permute.xlu0 0
        %839 = vperm.xlu0 %838, %v631
        %v840 = vpop.permute.xlu0 %839
        %843 = vset.pattern.permute.xlu0 0
        %844 = vperm.xlu0 %843, %v634
        %v845 = vpop.permute.xlu0 %844
        %848 = vset.pattern.permute.xlu0 0
        %849 = vperm.xlu0 %848, %v637
        %v850 = vpop.permute.xlu0 %849
        %v852 = vmul.f32 %v815, %v641
        %v853 = vmul.f32 %v820, %v642
        %v854 = vmul.f32 %v825, %v643
        %v855 = vmul.f32 %v830, %v644
        %v856 = vmul.f32 %v835, %v645
        %v857 = vmul.f32 %v840, %v646
        %v858 = vmul.f32 %v845, %v647
        %v859 = vmul.f32 %v850, %v648
        %860 = vmatpush.msra.mxu0 0.0
        %861 = vmatpush.msra.mxu0 0.0
        %862 = vmatpush.msra.mxu0 0.0
        %863 = vmatpush.msra.mxu0 0.0
        %864 = vmatpush.msra.mxu0 0.0
        %865 = vmatpush.msra.mxu0 0.0
        %866 = vmatpush.msra.mxu0 0.0
        %867 = vmatpush.msra.mxu0 0.0
        %868 = vmatpush.msra.mxu0 %v859
        %869 = vmatpush.msra.mxu0 %v858
        %870 = vmatpush.msra.mxu0 %v857
        %871 = vmatpush.msra.mxu0 %v856
        %872 = vmatpush.msra.mxu0 %v855
        %873 = vmatpush.msra.mxu0 %v854
        %874 = vmatpush.msra.mxu0 %v853
        %875 = vmatpush.msra.mxu0 %v852
        %876 = vmatmul.f32.gmra.mxu0 %v704
        %v877 = vpop.f32.mrf.mxu0
        %v878 = vadd.f32 0.0, %v877
        %879 = vdwg.mxu0
        %881 = vset.pattern.permute.xlu0 0
        %882 = vperm.xlu0 %881, %v556
        %v883 = vpop.permute.xlu0 %882
        %v885 = vadd.f32 %v883, %v878
        %vm886 = vcmp.gt.f32.partialorder %v885, 0.0
        %v887 = vmul.f32 %v885, 0.2
        %v888 = vsel %vm886, %v885, %v887
        %v889 = vmul.f32 %v888, %v653
        %v890 = vsel %vm736, %v889, -inf
        %v891 = vrot.slane %v890, 4
        %v892 = vmax.f32 %v890, %v891
        %v893 = vrot.slane %v892, 2
        %v894 = vmax.f32 %v892, %v893
        %v895 = vrot.slane %v894, 1
        %v896 = vmax.f32 %v894, %v895
        %v897 = vsub.f32 %v889, %v896
        %v898 = vmul.f32 %v897, 1.442695
        %v899 = vpow.pop %v898
        %v900 = vsel %vm736, %v899, 0.0
        %v901 = vrot.slane %v900, 4
        %v902 = vadd.f32 %v900, %v901
        %v903 = vrot.slane %v902, 2
        %v904 = vadd.f32 %v902, %v903
        %v905 = vrot.slane %v904, 1
        %v906 = vadd.f32 %v904, %v905
        %v907 = vrcp.pop %v906
        %v908 = vmul.f32 %v899, %v907
        %v909 = vmul.f32 %v908, %v653
        %v911 = vsel %vm736, %v909, 0
        %913 = vmatpush.msra.mxu0 0.0
        %914 = vmatpush.msra.mxu0 0.0
        %915 = vmatpush.msra.mxu0 0.0
        %916 = vmatpush.msra.mxu0 0.0
        %917 = vmatpush.msra.mxu0 0.0
        %918 = vmatpush.msra.mxu0 0.0
        %919 = vmatpush.msra.mxu0 0.0
        %920 = vmatpush.msra.mxu0 0.0
        %921 = vmatpush.msra.mxu0 0.0
        %922 = vmatpush.msra.mxu0 0.0
        %923 = vmatpush.msra.mxu0 0.0
        %924 = vmatpush.msra.mxu0 0.0
        %925 = vmatpush.msra.mxu0 0.0
        %926 = vmatpush.msra.mxu0 0.0
        %927 = vmatpush.msra.mxu0 0.0
        %928 = vmatpush.msra.mxu0 %v640
        %929 = vmatmul.f32.gmra.mxu0 %v911
        %v930 = vpop.f32.mrf.mxu0
        %v931 = vadd.f32 0.0, %v930
        %932 = vdwg.mxu0
        %v933 = vmul.f32 %v639, %v931
        %v935 = vsel %vm702, %v933, 0
        %937 = vmatpush.msra.mxu0 0.0
        %938 = vmatpush.msra.mxu0 0.0
        %939 = vmatpush.msra.mxu0 0.0
        %940 = vmatpush.msra.mxu0 0.0
        %941 = vmatpush.msra.mxu0 0.0
        %942 = vmatpush.msra.mxu0 0.0
        %943 = vmatpush.msra.mxu0 0.0
        %944 = vmatpush.msra.mxu0 0.0
        %945 = vmatpush.msra.mxu0 %v517
        %946 = vmatpush.msra.mxu0 %v514
        %947 = vmatpush.msra.mxu0 %v511
        %948 = vmatpush.msra.mxu0 %v508
        %949 = vmatpush.msra.mxu0 %v505
        %950 = vmatpush.msra.mxu0 %v502
        %951 = vmatpush.msra.mxu0 %v499
        %952 = vmatpush.msra.mxu0 %v496
        %953 = vmatmul.f32.gmra.mxu0 %v935
        %v954 = vpop.f32.mrf.mxu0
        %v955 = vadd.f32 0.0, %v954
        %956 = vdwg.mxu0
        %v957 = vadd.f32 %v388, %v955
        %vm958 = vcmp.gt.f32.partialorder %v957, 0.0
        %v959 = vmin.f32 %v957, 0.0
        %v960 = vmul.f32 %v959, 1.442695
        %v961 = vpow.pop %v960
        %v962 = vsub.f32 %v961, 1.0
        %v963 = vsel %vm958, %v957, %v962
        %964 = vst [vmem:[%s342 + $0x8] sm:$0xff] %v963
        %s965 = sand.u32 %s230, 1
        %s966 = scalar_lea.sflag [#allocation3], %s965
        %s967 = sand.u32 %s230, 1
        %s968 = smul.addr %s967, 16
        %s969 = scalar_lea.vmem [#allocation2], %s968
        // Predicated region
        $region57: #{tpu_custom_call.1} parent=55 // pred_check
          %p970 = pneg %p240
        $region58: #{tpu_custom_call.1} parent=55 // pred_check_branch
          %972 = sbr.rel (%p970) target = $region60
        $region59: #{tpu_custom_call.1} parent=55 // pred_region
          %s973 = smul.u32 2, %s23
          %975 = vsyncadd %s966, 0
          %s976 = smul.addr %s973, 8
          %s977 = scalar_lea.hbm %s9, %s976
          %s978 = sshll.u32 %s969, 4
          %s979 = int_to_ptr.vmem [resolvable:$true] %s978
          %s980 = sshll.u32 %s977, 4
          %s981 = int_to_ptr.hbm [resolvable:$true] %s980
          %986 = dma.vmem_to_hbm [thread:$0]  %s979, 256, %s981, %s966, 128, 128, 8
        $region60: #{tpu_custom_call.1} parent=55 // pred_fallthru
          _
      $region56: #{tpu_custom_call.1} parent=5 // pred_fallthru
        _
      %p987 = scmp.le.s32.totalorder 2, %s18
      // Predicated region
      $region61: #{tpu_custom_call.1} parent=5 // pred_check
        %p988 = pneg %p987
      $region62: #{tpu_custom_call.1} parent=5 // pred_check_branch
        %990 = sbr.rel (%p988) target = $region64
      $region63: #{tpu_custom_call.1} parent=5 // pred_region
        %s991 = ssub.s32 %s18, 2
        // Predicated region
        $region65: #{tpu_custom_call.1} parent=63 // pred_check
          %p992 = pneg %p246
        $region66: #{tpu_custom_call.1} parent=63 // pred_check_branch
          %994 = sbr.rel (%p992) target = $region68
        $region67: #{tpu_custom_call.1} parent=63 // pred_region
          %s995 = sand.u32 %s231, 1
          %s996 = scalar_lea.sflag [#allocation3], %s995
          %s997 = sand.u32 %s231, 1
          %s998 = smul.addr %s997, 16
          %s999 = scalar_lea.vmem [#allocation2], %s998
          %1001 = dma.done %s996, 256
        $region68: #{tpu_custom_call.1} parent=63 // pred_fallthru
          _
      $region64: #{tpu_custom_call.1} parent=5 // pred_fallthru
        _
    $region6: #{tpu_custom_call.1} parent=1 // loop_footer
      %s22 = sadd.s32 1, %s18
    $region7: #{tpu_custom_call.1} parent=1 // loop_footer_branch
      %17 = sbr.rel target = $region3
    $region8: #{tpu_custom_call.1} parent=1 // loop_exit
      _
    %1002 = vsyncpa [#allocation3], 1
    %s1003 = scalar_lea.sflag [#allocation3], 1
    %1004 = vsyncpa %s1003, 1

</llo_original>
